<compile_context>
chip_gen: v7x
topology: tpu7x:2x2x1
jax: 0.10.0
libtpu: 0.0.40
codegen_flags: <defaults>
</compile_context>

<pallas_src>
import functools
import math

import jax
import jax.numpy as jnp
from jax import lax
from jax.experimental import pallas as pl
from jax.experimental.pallas import tpu as pltpu


def make_positional_table(max_len: int, d_model: int, dtype=jnp.float32):
    """Deterministic sinusoidal table, shape (max_len, 1, d_model) like the buffer `pe`."""
    position = jnp.arange(max_len, dtype=jnp.float32)[:, None]                   # (max_len, 1)
    div_term = jnp.exp(
        jnp.arange(0, d_model, 2, dtype=jnp.float32) * (-math.log(10000.0) / d_model)
    )                                                                            # (d_model//2,)
    pe = jnp.zeros((max_len, d_model), dtype=jnp.float32)
    pe = pe.at[:, 0::2].set(jnp.sin(position * div_term))
    pe = pe.at[:, 1::2].set(jnp.cos(position * div_term))
    return pe[:, None, :].astype(dtype)                                          # (max_len, 1, d_model)


def _pe_kernel(seed_ref, x_ref, pe_ref, o_ref, *, batch: int, dropout_p: float, train: bool):
    # x_ref/o_ref: (ts, B*D) lane-dense; pe_ref: (ts, D) windowed out of (max_len, 1, D)
    ts, bd = o_ref.shape
    pe_row = pe_ref[...]                                   # (ts, D), already in x dtype
    val = x_ref[...] + jnp.tile(pe_row, (1, batch))        # broadcast over batch (VPU)

    apply_dropout = train and dropout_p > 0.0
    if apply_dropout and dropout_p >= 1.0:
        # p == 1.0: everything is dropped (avoids uint32 wrap / divide-by-zero scale)
        val = jnp.zeros_like(val)
    elif apply_dropout:
        keep_t = int(round((1.0 - dropout_p) * 4294967296.0))
        if keep_t < 4294967296:          # else keep-prob rounds to 1.0 -> dropout is a no-op
            # Stateless counter-based RNG: hash(global element index, seed).
            # No tile-overlap between seeds, safe under a "parallel" grid axis.
            seed = seed_ref[0].astype(jnp.uint32)
            base = (pl.program_id(0) * ts).astype(jnp.uint32)
            rows = lax.broadcasted_iota(jnp.uint32, (ts, bd), 0) + base
            cols = lax.broadcasted_iota(jnp.uint32, (ts, bd), 1)
            h = rows * jnp.uint32(bd) + cols
            h = h * jnp.uint32(0x9E3779B1) + seed * jnp.uint32(0x85EBCA77)
            h = h ^ (h >> 16)
            h = h * jnp.uint32(0x7FEB352D)
            h = h ^ (h >> 15)
            h = h * jnp.uint32(0x846CA68B)
            h = h ^ (h >> 16)
            keep = h < jnp.uint32(keep_t)                  # P(keep) = 1 - p
            scale = jnp.asarray(1.0 / (1.0 - dropout_p), val.dtype)
            val = jnp.where(keep, val * scale, jnp.zeros_like(val))

    o_ref[...] = val.astype(o_ref.dtype)


def _choose_seq_tile(S: int, row_bytes: int, target_bytes: int = 2 * 1024 * 1024) -> int:
    """~2 MiB x-tile: multiple of 8 sublanes, divisor of S (fits every gen's scoped VMEM
    with double-buffered in+out while amortizing the ~0.35 us/grid-step overhead)."""
    ts = (target_bytes // max(row_bytes, 1)) // 8 * 8
    ts = max(8, min(ts, S))
    if ts >= S:
        return S
    while ts > 8 and S % ts:
        ts -= 8
    return ts if S % ts == 0 else S


def positional_encoding(x, pe, *, dropout_p: float = 0.1, train: bool = False,
                        seed: int = 0, seq_tile: int | None = None,
                        donate_x: bool = False):
    """x: (S, B, D); pe: (max_len, 1, D).  Returns dropout(x + pe[:S])."""
    S, B, D = x.shape
    assert pe.shape[0] >= S and pe.shape[1] == 1 and pe.shape[2] == D
    if pe.dtype != x.dtype:
        pe = pe.astype(x.dtype)                            # keep pe DMA + add in x's dtype

    BD = B * D
    x2 = x.reshape(S, BD)                                  # free: contiguous row-major

    itemsize = jnp.dtype(x.dtype).itemsize
    ts = _choose_seq_tile(S, BD * itemsize) if seq_tile is None else min(seq_tile, S)
    assert S % ts == 0
    grid = (S // ts,)

    kernel = functools.partial(_pe_kernel, batch=B,
                               dropout_p=float(dropout_p), train=bool(train))

    out2 = pl.pallas_call(
        kernel,
        out_shape=jax.ShapeDtypeStruct((S, BD), x.dtype),
        grid_spec=pltpu.PrefetchScalarGridSpec(
            num_scalar_prefetch=1,                         # seed lands in SMEM
            grid=grid,
            in_specs=[
                pl.BlockSpec((ts, BD), lambda i, seed_ref: (i, 0)),          # x, lane-dense
                pl.BlockSpec((ts, None, D), lambda i, seed_ref: (i, 0, 0)),  # windows pe[:S]
            ],
            out_specs=pl.BlockSpec((ts, BD), lambda i, seed_ref: (i, 0)),
        ),
        compiler_params=pltpu.CompilerParams(
            dimension_semantics=("parallel",)),            # stateless RNG -> megacore-safe
        input_output_aliases=({1: 0} if donate_x else {}), # optional in-place on x
    )(jnp.array([seed], dtype=jnp.int32), x2, pe)

    return out2.reshape(S, B, D)


if __name__ == "__main__":
    S, B, D = 8, 2, 32          # seq, batch, d_model
    MAX_LEN = 2000              # as in the module __init__
    DROPOUT_P = 0.1

    key = jax.random.PRNGKey(0)
    x = jax.random.normal(key, (S, B, D), dtype=jnp.float32)
    pe = make_positional_table(MAX_LEN, D, dtype=jnp.float32)

    # eval mode (dropout = identity) — must match the reference exactly
    out_eval = jax.block_until_ready(
        positional_encoding(x, pe, dropout_p=DROPOUT_P, train=False))
    ref = x + pe[:S, :, :]                                 # broadcast over batch
    assert out_eval.shape == (S, B, D) and out_eval.dtype == x.dtype
    assert jnp.allclose(out_eval, ref, atol=1e-6, rtol=1e-6)

    # training mode (stochastic, deterministic seed) — shape / inverted-dropout semantics
    out_train = jax.block_until_ready(
        positional_encoding(x, pe, dropout_p=DROPOUT_P, train=True, seed=1234))
    assert out_train.shape == (S, B, D)
    scaled = out_train * (1.0 - DROPOUT_P)                 # survivors are ref / (1 - p)
    ok = jnp.logical_or(jnp.isclose(out_train, 0.0),
                        jnp.isclose(scaled, ref, atol=1e-5, rtol=1e-5))
    assert bool(jnp.all(ok))

    print("KERNEL_OK")
</pallas_src>

<mosaic_0001>
module attributes {stable_mosaic.version = 11 : i64} {
  func.func @_pe_kernel(%arg0: i32, %arg1: memref<1xi32, #tpu.memory_space<smem>>, %arg2: memref<8x64xf32, #tpu.memory_space<vmem>>, %arg3: memref<8x1x32xf32, #tpu.memory_space<vmem>>, %arg4: memref<8x64xf32, #tpu.memory_space<vmem>>) attributes {dimension_semantics = [#tpu.dimension_semantics<parallel>], iteration_bounds = array<i64: 1>, scalar_prefetch = 1 : i64, scratch_operands = 0 : i64, tpu.core_type = #tpu.core_type<tc>, window_params = [{transform_indices = @transform_0, window_bounds = array<i64: 8, 64>}, {transform_indices = @transform_1, window_bounds = array<i64: 8, 1, 32>}, {transform_indices = @transform_2, window_bounds = array<i64: 8, 64>}]} {
    %c0 = arith.constant 0 : index
    %c0_0 = arith.constant 0 : index
    %c0_1 = arith.constant 0 : index
    %0 = vector.load %arg3[%c0, %c0_0, %c0_1] : memref<8x1x32xf32, #tpu.memory_space<vmem>>, vector<8x1x32xf32>
    %1 = vector.shape_cast %0 : vector<8x1x32xf32> to vector<8x32xf32>
    %c0_2 = arith.constant 0 : index
    %c0_3 = arith.constant 0 : index
    %2 = vector.load %arg2[%c0_2, %c0_3] : memref<8x64xf32, #tpu.memory_space<vmem>>, vector<8x64xf32>
    %3 = tpu.concatenate %1, %1 in 1 : vector<8x32xf32>, vector<8x32xf32> -> vector<8x64xf32>
    %4 = arith.addf %2, %3 : vector<8x64xf32>
    %c0_4 = arith.constant 0 : index
    %c0_5 = arith.constant 0 : index
    %5 = vector.load %arg4[%c0_4, %c0_5] : memref<8x64xf32, #tpu.memory_space<vmem>>, vector<8x64xf32>
    tpu.vector_store %arg4[%c0_4, %c0_5], %4 {strides = array<i32>} : memref<8x64xf32, #tpu.memory_space<vmem>>, vector<8x64xf32>,
    return
  }
  func.func @transform_0(%arg0: i32, %arg1: memref<1xi32, #tpu.memory_space<smem>>) -> (i32, i32) {
    %c0_i32 = arith.constant 0 : i32
    %c0_i32_0 = arith.constant 0 : i32
    return %arg0, %c0_i32 : i32, i32
  }
  func.func @transform_1(%arg0: i32, %arg1: memref<1xi32, #tpu.memory_space<smem>>) -> (i32, i32, i32) {
    %c0_i32 = arith.constant 0 : i32
    %c0_i32_0 = arith.constant 0 : i32
    %c0_i32_1 = arith.constant 0 : i32
    return %arg0, %c0_i32, %c0_i32_0 : i32, i32, i32
  }
  func.func @transform_2(%arg0: i32, %arg1: memref<1xi32, #tpu.memory_space<smem>>) -> (i32, i32) {
    %c0_i32 = arith.constant 0 : i32
    %c0_i32_0 = arith.constant 0 : i32
    return %arg0, %c0_i32 : i32, i32
  }
}

</mosaic_0001>

<llo_original>
// kernel: tpu_custom_call.1
$region0: #{tpu_custom_call.1}
  #allocation0 [shape = 'u32[]', space=smem, size = 0x4, offset = 0x4, fixed_abs, tag = 'smem constant byte address 0x4 - core index']
  #allocation1 [shape = 'u32[144,128]{1,0:T(1,128)}', space=vmem, size = 0x12000, scoped, tag = 'internal scratch']
  #allocation2 [shape = 's32[1]{0}', space=sflag, size = 0x4, scoped, tag = 'scoped memory for tpu_custom_call.1']
  #allocation3 [shape = 's32[1]{0:T(128)S(6)}', space=smem, size = 0x200, scoped, tag = 'prefetched SMEM operand 0']
  %s0 = inlined_call_operand.<no memory space> [shape: s32[1], index: 0, kind: input, shape index: {}]
  %s1 = inlined_call_operand.vmem [shape: f32[8,64], index: 1, kind: input, shape index: {}]
  %s2 = inlined_call_operand.vmem [shape: f32[2000,1,32], index: 2, kind: input, shape index: {}]
  %s3 = inlined_call_operand.hbm [shape: f32[8,64], index: 3, kind: output, shape index: {}]
  %s4 = sld [smem:[#allocation0]]
  $region18: #{tpu_custom_call.1} parent=0
    _
  %s6 = ssub.s32 1, %s4
  %s7 = scalar_select 0, %s6, %s4
  %8 = sst [smem:[#allocation3]] %s0
  $region1: #{tpu_custom_call.1} parent=0
    #allocation4 [shape = 'u8[4096]{0}', space=vmem, size = 0x1000, scoped, tag = 'output window, operand 0, single buffered']
    #allocation5 [shape = 's32[1]{0}', space=sflag, size = 0x4, scoped, tag = 'scoped memory for tpu_custom_call.1']
    %9 = vsyncpa [#allocation5], 0
    // Predicated region
    $region2: #{tpu_custom_call.1} parent=1 // pred_check
      _
    $region3: #{tpu_custom_call.1} parent=1 // pred_check_branch
      %11 = sbr.rel (0) target = $region5
    $region4: #{tpu_custom_call.1} parent=1 // pred_region
      _
    $region5: #{tpu_custom_call.1} parent=1 // pred_fallthru
      _
    // Predicated region
    $region6: #{tpu_custom_call.1} parent=1 // pred_check
      _
    $region7: #{tpu_custom_call.1} parent=1 // pred_check_branch
      %13 = sbr.rel (0) target = $region9
    $region8: #{tpu_custom_call.1} parent=1 // pred_region
      _
    $region9: #{tpu_custom_call.1} parent=1 // pred_fallthru
      _
    %v14 = vld [vmem:[%s2] sm:$0x1]
    %v15 = vld [vmem:[%s2 + $0x1] sm:$0x1]
    %v16 = vld [vmem:[%s2 + $0x2] sm:$0x1]
    %v17 = vld [vmem:[%s2 + $0x3] sm:$0x1]
    %v18 = vld [vmem:[%s2 + $0x4] sm:$0x1]
    %v19 = vld [vmem:[%s2 + $0x5] sm:$0x1]
    %v20 = vld [vmem:[%s2 + $0x6] sm:$0x1]
    %v21 = vld [vmem:[%s2 + $0x7] sm:$0x1]
    %v22 = vld [vmem:[%s1] sm:$0xff]
    %v31 = vcombine.low %v14, %v15
    %v32 = vcombine.low %v16, %v17
    %v33 = vcombine.low %v18, %v19
    %v34 = vcombine.low %v20, %v21
    %v36 = vunpack.c.l.s4 1966171168
    %v37 = vunpack.c.0.s8 %v36
    %v38 = vlaneseq
    %v39 = vshrl.u32 %v38, 7
    %v40 = vsub.s32 %v37, %v39
    %v41 = vrot.slane %v31, %v40
    %v43 = vunpack.c.l.s4 1966171168
    %v44 = vunpack.c.0.s8 %v43
    %v45 = vlaneseq
    %v46 = vshrl.u32 %v45, 7
    %v47 = vsub.s32 %v44, %v46
    %v48 = vrot.slane %v32, %v47
    %v50 = vunpack.c.l.s4 1966171168
    %v51 = vunpack.c.0.s8 %v50
    %v52 = vlaneseq
    %v53 = vshrl.u32 %v52, 7
    %v54 = vsub.s32 %v51, %v53
    %v55 = vrot.slane %v33, %v54
    %v57 = vunpack.c.l.s4 1966171168
    %v58 = vunpack.c.0.s8 %v57
    %v59 = vlaneseq
    %v60 = vshrl.u32 %v59, 7
    %v61 = vsub.s32 %v58, %v60
    %v62 = vrot.slane %v34, %v61
    %v63 = vcombine.low %v41, %v48
    %v64 = vcombine.low %v55, %v62
    %v66 = vunpack.c.l.s4 1966171168
    %v67 = vunpack.c.0.s8 %v66
    %v68 = vlaneseq
    %v69 = vshrl.u32 %v68, 7
    %v70 = vsub.s32 %v67, %v69
    %v71 = vrot.slane %v63, %v70
    %v73 = vunpack.c.l.s4 1966171168
    %v74 = vunpack.c.0.s8 %v73
    %v75 = vlaneseq
    %v76 = vshrl.u32 %v75, 7
    %v77 = vsub.s32 %v74, %v76
    %v78 = vrot.slane %v64, %v77
    %v79 = vcombine.low %v71, %v78
    %81 = vrot.lane.b32.xlu0 %v79, 32
    %v82 = vpop.permute.xlu0 %81
    %vm84 = vcmask 261120
    %v85 = vsel %vm84, %v79, %v82
    %v86 = vadd.f32 %v22, %v85
    %vm87 = vcmask 523264
    %88 = vst.msk [vmem:[#allocation4] sm:$0xff] %vm87, %v86
    // Predicated region
    $region10: #{tpu_custom_call.1} parent=1 // pred_check
      _
    $region11: #{tpu_custom_call.1} parent=1 // pred_check_branch
      %90 = sbr.rel (0) target = $region13
    $region12: #{tpu_custom_call.1} parent=1 // pred_region
      %s92 = ssub.s32 128, 128
      %93 = vsyncadd [#allocation5], %s92
      %s95 = sshll.u32 [#allocation4], 4
      %s96 = int_to_ptr.vmem [resolvable:$true] %s95
      %98 = dma.vmem_to_hbm [thread:$0]  %s96, 128, %s3, [#allocation5]
    $region13: #{tpu_custom_call.1} parent=1 // pred_fallthru
      _
    // Predicated region
    $region14: #{tpu_custom_call.1} parent=1 // pred_check
      _
    $region15: #{tpu_custom_call.1} parent=1 // pred_check_branch
      %100 = sbr.rel (0) target = $region17
    $region16: #{tpu_custom_call.1} parent=1 // pred_region
      %101 = dma.done [#allocation5], 128
    $region17: #{tpu_custom_call.1} parent=1 // pred_fallthru
      _
    %102 = vsyncpa [#allocation5], 1

</llo_original>
